<compile_context>
chip_gen: v7x
topology: tpu7x:2x2x1
jax: 0.10.0
libtpu: 0.0.40
codegen_flags: <defaults>
</compile_context>

<pallas_src>
import functools

import jax
import jax.numpy as jnp
from jax.experimental import pallas as pl
from jax.experimental.pallas import tpu as pltpu

LANE = 128        # lane width (last dim of every tile)
ROW_ALIGN = 32    # sublane alignment for the single-block path (safe for f32/bf16/int8)
TR_MAX = 1024     # rows per tile: 1024 * 128 elements / stream / grid step


def antibiotics_kernel(params_ref, policy_ref, dysp_ref, cough_ref,
                       pain_ref, fever_ref, y_ref, out_ref):
    """params_ref: SMEM (7,) f32 = [bias, c0..c5]; feature refs: (TR, 128) VMEM tiles."""
    policy = policy_ref[...].astype(jnp.float32)
    dysp = dysp_ref[...].astype(jnp.float32)
    cough = cough_ref[...].astype(jnp.float32)
    pain = pain_ref[...].astype(jnp.float32)
    fever = fever_ref[...].astype(jnp.float32)
    y = y_ref[...].astype(jnp.float32)

    low_fever = (fever == 1.0).astype(jnp.float32)
    high_fever = (fever == 2.0).astype(jnp.float32)

    logit = (params_ref[0]
             + params_ref[1] * policy
             + params_ref[2] * dysp
             + params_ref[3] * cough
             + params_ref[4] * pain
             + params_ref[5] * low_fever
             + params_ref[6] * high_fever)

    # log P(y | parents):
    #   y == 1 -> log(sigmoid(logit)); y == 0 -> log(1 - sigmoid(logit)) = log(sigmoid(-logit))
    # computed via the stable log-sigmoid of +/- logit (one exp + one log1p on the EUP).
    z = jnp.where(y == 1.0, logit, -logit)
    out_ref[...] = jnp.minimum(z, 0.0) - jnp.log1p(jnp.exp(-jnp.abs(z)))


def _round_up(x, m):
    return ((x + m - 1) // m) * m


@functools.partial(jax.jit, static_argnames=("tr_max",))
def antibiotics_forward(sample, bias, coeff, *, tr_max=TR_MAX):
    """JAX/Pallas equivalent of Antibiotics.forward.

    sample: dict with 1-D arrays (any numeric dtype) of equal length B for keys
            'policy', 'dysp', 'cough', 'pain', 'fever', 'antibiotics'.
    bias:  (1,)  float32;  coeff: (6,) float32.
    returns: (B,) float32 log-probabilities.
    """
    feats = [sample['policy'], sample['dysp'], sample['cough'],
             sample['pain'], sample['fever'], sample['antibiotics']]
    B = feats[0].shape[0]

    rows = pl.cdiv(max(B, 1), LANE)
    if rows <= tr_max:
        # Single grid step: block == padded array; keep the sublane dim a multiple of
        # 32 so narrow (int8/bf16) feature dtypes stay on their native tiling.
        rows_pad = _round_up(rows, ROW_ALIGN)
        tr = rows_pad
    else:
        # Multi-step grid: pad B only to a lane multiple; the final partial block is
        # clipped by Pallas (no whole-array jnp.pad just because tr is big).
        rows_pad = rows
        tr = tr_max
    B_pad = rows_pad * LANE
    grid = (pl.cdiv(rows_pad, tr),)

    def prep(x):
        # 1-D -> (rows_pad, LANE). jnp.pad (a full copy) only fires for ragged B.
        if B_pad != B:
            x = jnp.pad(x, (0, B_pad - B))
        return x.reshape(rows_pad, LANE)

    tiles = [prep(x) for x in feats]
    params = jnp.concatenate(
        [jnp.reshape(bias, (-1,)), jnp.reshape(coeff, (-1,))]).astype(jnp.float32)  # (7,)

    out = pl.pallas_call(
        antibiotics_kernel,
        out_shape=jax.ShapeDtypeStruct((rows_pad, LANE), jnp.float32),
        grid=grid,
        in_specs=([pl.BlockSpec(memory_space=pltpu.MemorySpace.SMEM)]             # params
                  + [pl.BlockSpec((tr, LANE), lambda i: (i, 0)) for _ in range(6)]),
        out_specs=pl.BlockSpec((tr, LANE), lambda i: (i, 0)),
        compiler_params=pltpu.CompilerParams(
            # On v7x, pltpu.CORE_PARALLEL on this axis can shard the grid across both
            # TensorCores; "parallel" is the portable default (no-op on v5e/v6e).
            dimension_semantics=("parallel",)),
    )(params, *tiles)

    # Padded tail elements hold valid-but-meaningless values; slice them off.
    return out.reshape(-1)[:B]


def antibiotics_forward_ref(sample, bias, coeff):
    """Pure-JAX reference mirroring the torch module exactly (sigmoid + log + where)."""
    f32 = lambda x: jnp.asarray(x, jnp.float32)
    fever = f32(sample['fever'])
    low_fever = jnp.where(fever == 1, 1.0, 0.0)
    high_fever = jnp.where(fever == 2, 1.0, 0.0)
    y = f32(sample['antibiotics'])
    logit = (bias[0]
             + coeff[0] * f32(sample['policy']) + coeff[1] * f32(sample['dysp'])
             + coeff[2] * f32(sample['cough']) + coeff[3] * f32(sample['pain'])
             + coeff[4] * low_fever + coeff[5] * high_fever)
    prob = jax.nn.sigmoid(logit)
    return jnp.where(y == 1, jnp.log(prob), jnp.log(1.0 - prob))


def _make_sample(key, B, dtype):
    ks = jax.random.split(key, 6)
    bern = lambda k: jax.random.bernoulli(k, 0.5, (B,)).astype(dtype)
    return {
        'policy':      bern(ks[0]),
        'dysp':        bern(ks[1]),
        'cough':       bern(ks[2]),
        'pain':        bern(ks[3]),
        'fever':       jax.random.randint(ks[4], (B,), 0, 3).astype(dtype),
        'antibiotics': bern(ks[5]),
    }


if __name__ == "__main__":
    key = jax.random.PRNGKey(0)
    k_bias, k_coeff, k_s1, k_s2, k_s3 = jax.random.split(key, 5)

    # Parameters (torch.rand -> uniform [0, 1)), deterministic from PRNGKey(0).
    bias = jax.random.uniform(k_bias, (1,), dtype=jnp.float32)
    coeff = jax.random.uniform(k_coeff, (6,), dtype=jnp.float32)   # n_parents + 1 = 6

    def check(sample, B, **kw):
        out = jax.block_until_ready(antibiotics_forward(sample, bias, coeff, **kw))
        ref = antibiotics_forward_ref(sample, bias, coeff)
        assert out.shape == (B,), f"bad shape for B={B}: {out.shape}"
        assert jnp.allclose(out, ref, atol=1e-5, rtol=1e-4), f"mismatch vs reference (B={B})"

    # Case 1: lane-aligned small batch; int8 features stay narrow in HBM (in-kernel cast).
    check(_make_sample(k_s1, 256, jnp.int8), 256)

    # Case 2: ragged small batch (exercises the lane-pad + slice path) with int8 features.
    check(_make_sample(k_s2, 300, jnp.int8), 300)

    # Case 3: multi-step grid with a clipped partial boundary block and ragged tail
    # (tr_max shrunk so the multi-block path is exercised at a small shape).
    B3 = 41 * 128 + 17
    check(_make_sample(k_s3, B3, jnp.float32), B3, tr_max=32)

    print("KERNEL_OK")
</pallas_src>

<mosaic_0001>
module attributes {stable_mosaic.version = 11 : i64} {
  func.func @antibiotics_kernel(%arg0: i32, %arg1: memref<7xf32, #tpu.memory_space<smem>>, %arg2: memref<32x128xi8, #tpu.memory_space<vmem>>, %arg3: memref<32x128xi8, #tpu.memory_space<vmem>>, %arg4: memref<32x128xi8, #tpu.memory_space<vmem>>, %arg5: memref<32x128xi8, #tpu.memory_space<vmem>>, %arg6: memref<32x128xi8, #tpu.memory_space<vmem>>, %arg7: memref<32x128xi8, #tpu.memory_space<vmem>>, %arg8: memref<32x128xf32, #tpu.memory_space<vmem>>) attributes {dimension_semantics = [#tpu.dimension_semantics<parallel>], iteration_bounds = array<i64: 1>, scalar_prefetch = 0 : i64, scratch_operands = 0 : i64, tpu.core_type = #tpu.core_type<tc>, window_params = [{transform_indices = @transform_0, window_bounds = array<i64: 7>}, {transform_indices = @transform_1, window_bounds = array<i64: 32, 128>}, {transform_indices = @transform_2, window_bounds = array<i64: 32, 128>}, {transform_indices = @transform_3, window_bounds = array<i64: 32, 128>}, {transform_indices = @transform_4, window_bounds = array<i64: 32, 128>}, {transform_indices = @transform_5, window_bounds = array<i64: 32, 128>}, {transform_indices = @transform_6, window_bounds = array<i64: 32, 128>}, {transform_indices = @transform_7, window_bounds = array<i64: 32, 128>}]} {
    %c0 = arith.constant 0 : index
    %c0_0 = arith.constant 0 : index
    %0 = vector.load %arg2[%c0, %c0_0] : memref<32x128xi8, #tpu.memory_space<vmem>>, vector<32x128xi8>
    %1 = arith.sitofp %0 : vector<32x128xi8> to vector<32x128xf32>
    %c0_1 = arith.constant 0 : index
    %c0_2 = arith.constant 0 : index
    %2 = vector.load %arg3[%c0_1, %c0_2] : memref<32x128xi8, #tpu.memory_space<vmem>>, vector<32x128xi8>
    %3 = arith.sitofp %2 : vector<32x128xi8> to vector<32x128xf32>
    %c0_3 = arith.constant 0 : index
    %c0_4 = arith.constant 0 : index
    %4 = vector.load %arg4[%c0_3, %c0_4] : memref<32x128xi8, #tpu.memory_space<vmem>>, vector<32x128xi8>
    %5 = arith.sitofp %4 : vector<32x128xi8> to vector<32x128xf32>
    %c0_5 = arith.constant 0 : index
    %c0_6 = arith.constant 0 : index
    %6 = vector.load %arg5[%c0_5, %c0_6] : memref<32x128xi8, #tpu.memory_space<vmem>>, vector<32x128xi8>
    %7 = arith.sitofp %6 : vector<32x128xi8> to vector<32x128xf32>
    %c0_7 = arith.constant 0 : index
    %c0_8 = arith.constant 0 : index
    %8 = vector.load %arg6[%c0_7, %c0_8] : memref<32x128xi8, #tpu.memory_space<vmem>>, vector<32x128xi8>
    %9 = arith.sitofp %8 : vector<32x128xi8> to vector<32x128xf32>
    %c0_9 = arith.constant 0 : index
    %c0_10 = arith.constant 0 : index
    %10 = vector.load %arg7[%c0_9, %c0_10] : memref<32x128xi8, #tpu.memory_space<vmem>>, vector<32x128xi8>
    %11 = arith.sitofp %10 : vector<32x128xi8> to vector<32x128xf32>
    %cst = arith.constant 1.000000e+00 : f32
    %12 = vector.broadcast %cst : f32 to vector<32x128xf32>
    %13 = arith.cmpf oeq, %9, %12 : vector<32x128xf32>
    %14 = arith.extui %13 : vector<32x128xi1> to vector<32x128xi32>
    %15 = arith.sitofp %14 : vector<32x128xi32> to vector<32x128xf32>
    %cst_11 = arith.constant 2.000000e+00 : f32
    %16 = vector.broadcast %cst_11 : f32 to vector<32x128xf32>
    %17 = arith.cmpf oeq, %9, %16 : vector<32x128xf32>
    %18 = arith.extui %17 : vector<32x128xi1> to vector<32x128xi32>
    %19 = arith.sitofp %18 : vector<32x128xi32> to vector<32x128xf32>
    %c0_12 = arith.constant 0 : index
    %20 = memref.load %arg1[%c0_12] : memref<7xf32, #tpu.memory_space<smem>>
    %c1 = arith.constant 1 : index
    %21 = memref.load %arg1[%c1] : memref<7xf32, #tpu.memory_space<smem>>
    %22 = vector.broadcast %21 : f32 to vector<32x128xf32>
    %23 = arith.mulf %22, %1 : vector<32x128xf32>
    %24 = vector.broadcast %20 : f32 to vector<32x128xf32>
    %25 = arith.addf %24, %23 : vector<32x128xf32>
    %c2 = arith.constant 2 : index
    %26 = memref.load %arg1[%c2] : memref<7xf32, #tpu.memory_space<smem>>
    %27 = vector.broadcast %26 : f32 to vector<32x128xf32>
    %28 = arith.mulf %27, %3 : vector<32x128xf32>
    %29 = arith.addf %25, %28 : vector<32x128xf32>
    %c3 = arith.constant 3 : index
    %30 = memref.load %arg1[%c3] : memref<7xf32, #tpu.memory_space<smem>>
    %31 = vector.broadcast %30 : f32 to vector<32x128xf32>
    %32 = arith.mulf %31, %5 : vector<32x128xf32>
    %33 = arith.addf %29, %32 : vector<32x128xf32>
    %c4 = arith.constant 4 : index
    %34 = memref.load %arg1[%c4] : memref<7xf32, #tpu.memory_space<smem>>
    %35 = vector.broadcast %34 : f32 to vector<32x128xf32>
    %36 = arith.mulf %35, %7 : vector<32x128xf32>
    %37 = arith.addf %33, %36 : vector<32x128xf32>
    %c5 = arith.constant 5 : index
    %38 = memref.load %arg1[%c5] : memref<7xf32, #tpu.memory_space<smem>>
    %39 = vector.broadcast %38 : f32 to vector<32x128xf32>
    %40 = arith.mulf %39, %15 : vector<32x128xf32>
    %41 = arith.addf %37, %40 : vector<32x128xf32>
    %c6 = arith.constant 6 : index
    %42 = memref.load %arg1[%c6] : memref<7xf32, #tpu.memory_space<smem>>
    %43 = vector.broadcast %42 : f32 to vector<32x128xf32>
    %44 = arith.mulf %43, %19 : vector<32x128xf32>
    %45 = arith.addf %41, %44 : vector<32x128xf32>
    %cst_13 = arith.constant 1.000000e+00 : f32
    %46 = vector.broadcast %cst_13 : f32 to vector<32x128xf32>
    %47 = arith.cmpf oeq, %11, %46 : vector<32x128xf32>
    %cst_14 = arith.constant 0.000000e+00 : f32
    %48 = vector.broadcast %cst_14 : f32 to vector<32x128xf32>
    %49 = arith.subf %48, %45 : vector<32x128xf32>
    %50 = arith.select %47, %45, %49 : vector<32x128xi1>, vector<32x128xf32>
    %cst_15 = arith.constant 0.000000e+00 : f32
    %51 = vector.broadcast %cst_15 : f32 to vector<32x128xf32>
    %52 = arith.minimumf %50, %51 : vector<32x128xf32>
    %53 = math.absf %50 : vector<32x128xf32>
    %cst_16 = arith.constant 0.000000e+00 : f32
    %54 = vector.broadcast %cst_16 : f32 to vector<32x128xf32>
    %55 = arith.subf %54, %53 : vector<32x128xf32>
    %56 = math.exp %55 : vector<32x128xf32>
    %57 = math.log1p %56 : vector<32x128xf32>
    %58 = arith.subf %52, %57 : vector<32x128xf32>
    %c0_17 = arith.constant 0 : index
    %c0_18 = arith.constant 0 : index
    %59 = vector.load %arg8[%c0_17, %c0_18] : memref<32x128xf32, #tpu.memory_space<vmem>>, vector<32x128xf32>
    tpu.vector_store %arg8[%c0_17, %c0_18], %58 {strides = array<i32>} : memref<32x128xf32, #tpu.memory_space<vmem>>, vector<32x128xf32>,
    return
  }
  func.func @transform_0(%arg0: i32) -> i32 {
    %c0_i32 = arith.constant 0 : i32
    %c0_i32_0 = arith.constant 0 : i32
    return %c0_i32 : i32
  }
  func.func @transform_1(%arg0: i32) -> (i32, i32) {
    %c0_i32 = arith.constant 0 : i32
    %c0_i32_0 = arith.constant 0 : i32
    return %arg0, %c0_i32 : i32, i32
  }
  func.func @transform_2(%arg0: i32) -> (i32, i32) {
    %c0_i32 = arith.constant 0 : i32
    %c0_i32_0 = arith.constant 0 : i32
    return %arg0, %c0_i32 : i32, i32
  }
  func.func @transform_3(%arg0: i32) -> (i32, i32) {
    %c0_i32 = arith.constant 0 : i32
    %c0_i32_0 = arith.constant 0 : i32
    return %arg0, %c0_i32 : i32, i32
  }
  func.func @transform_4(%arg0: i32) -> (i32, i32) {
    %c0_i32 = arith.constant 0 : i32
    %c0_i32_0 = arith.constant 0 : i32
    return %arg0, %c0_i32 : i32, i32
  }
  func.func @transform_5(%arg0: i32) -> (i32, i32) {
    %c0_i32 = arith.constant 0 : i32
    %c0_i32_0 = arith.constant 0 : i32
    return %arg0, %c0_i32 : i32, i32
  }
  func.func @transform_6(%arg0: i32) -> (i32, i32) {
    %c0_i32 = arith.constant 0 : i32
    %c0_i32_0 = arith.constant 0 : i32
    return %arg0, %c0_i32 : i32, i32
  }
  func.func @transform_7(%arg0: i32) -> (i32, i32) {
    %c0_i32 = arith.constant 0 : i32
    %c0_i32_0 = arith.constant 0 : i32
    return %arg0, %c0_i32 : i32, i32
  }
}

</mosaic_0001>

<llo_original>
// kernel: antibiotics_forward.1
$region0: #{antibiotics_forward.1}
  #allocation0 [shape = 'u32[]', space=smem, size = 0x4, offset = 0x4, fixed_abs, tag = 'smem constant byte address 0x4 - core index']
  #allocation1 [shape = 'u32[144,128]{1,0:T(1,128)}', space=vmem, size = 0x12000, scoped, tag = 'internal scratch']
  %s0 = inlined_call_operand.vmem [shape: f32[7], index: 0, kind: input, shape index: {}]
  %s1 = inlined_call_operand.vmem [shape: s8[32,128], index: 1, kind: input, shape index: {}]
  %s2 = inlined_call_operand.vmem [shape: s8[32,128], index: 2, kind: input, shape index: {}]
  %s3 = inlined_call_operand.vmem [shape: s8[32,128], index: 3, kind: input, shape index: {}]
  %s4 = inlined_call_operand.vmem [shape: s8[32,128], index: 4, kind: input, shape index: {}]
  %s5 = inlined_call_operand.vmem [shape: s8[32,128], index: 5, kind: input, shape index: {}]
  %s6 = inlined_call_operand.vmem [shape: s8[32,128], index: 6, kind: input, shape index: {}]
  %s7 = inlined_call_operand.vmem [shape: f32[32,128], index: 7, kind: output, shape index: {}]
  %s8 = sld [smem:[#allocation0]]
  $region42: #{antibiotics_forward.1} parent=0
    _
  %s10 = ssub.s32 1, %s8
  %s11 = scalar_select 0, %s10, %s8
  $region1: #{antibiotics_forward.1} parent=0
    #allocation2 [shape = 'u8[512]{0}', space=smem, size = 0x200, scoped, tag = 'input window, operand 0, single buffered']
    #allocation3 [shape = 's32[1]{0}', space=sflag, size = 0x4, scoped, tag = 'scoped memory for antibiotics_forward.1']
    %12 = vsyncpa [#allocation3], 0
    // Predicated region
    $region2: #{antibiotics_forward.1} parent=1 // pred_check
      _
    $region3: #{antibiotics_forward.1} parent=1 // pred_check_branch
      %14 = sbr.rel (0) target = $region5
    $region4: #{antibiotics_forward.1} parent=1 // pred_region
      %s16 = ssub.s32 16, 16
      %17 = vsyncadd [#allocation3], %s16
      %s19 = sshll.u32 %s0, 4
      %s20 = int_to_ptr.vmem [resolvable:$true] %s19
      %22 = dma.vmem_to_smem %s20, 16, [#allocation2], [#allocation3]
    $region5: #{antibiotics_forward.1} parent=1 // pred_fallthru
      _
    // Predicated region
    $region6: #{antibiotics_forward.1} parent=1 // pred_check
      _
    $region7: #{antibiotics_forward.1} parent=1 // pred_check_branch
      %24 = sbr.rel (0) target = $region9
    $region8: #{antibiotics_forward.1} parent=1 // pred_region
      _
    $region9: #{antibiotics_forward.1} parent=1 // pred_fallthru
      _
    // Predicated region
    $region10: #{antibiotics_forward.1} parent=1 // pred_check
      _
    $region11: #{antibiotics_forward.1} parent=1 // pred_check_branch
      %26 = sbr.rel (0) target = $region13
    $region12: #{antibiotics_forward.1} parent=1 // pred_region
      _
    $region13: #{antibiotics_forward.1} parent=1 // pred_fallthru
      _
    // Predicated region
    $region14: #{antibiotics_forward.1} parent=1 // pred_check
      _
    $region15: #{antibiotics_forward.1} parent=1 // pred_check_branch
      %28 = sbr.rel (0) target = $region17
    $region16: #{antibiotics_forward.1} parent=1 // pred_region
      _
    $region17: #{antibiotics_forward.1} parent=1 // pred_fallthru
      _
    // Predicated region
    $region18: #{antibiotics_forward.1} parent=1 // pred_check
      _
    $region19: #{antibiotics_forward.1} parent=1 // pred_check_branch
      %30 = sbr.rel (0) target = $region21
    $region20: #{antibiotics_forward.1} parent=1 // pred_region
      _
    $region21: #{antibiotics_forward.1} parent=1 // pred_fallthru
      _
    // Predicated region
    $region22: #{antibiotics_forward.1} parent=1 // pred_check
      _
    $region23: #{antibiotics_forward.1} parent=1 // pred_check_branch
      %32 = sbr.rel (0) target = $region25
    $region24: #{antibiotics_forward.1} parent=1 // pred_region
      _
    $region25: #{antibiotics_forward.1} parent=1 // pred_fallthru
      _
    // Predicated region
    $region26: #{antibiotics_forward.1} parent=1 // pred_check
      _
    $region27: #{antibiotics_forward.1} parent=1 // pred_check_branch
      %34 = sbr.rel (0) target = $region29
    $region28: #{antibiotics_forward.1} parent=1 // pred_region
      _
    $region29: #{antibiotics_forward.1} parent=1 // pred_fallthru
      _
    // Predicated region
    $region30: #{antibiotics_forward.1} parent=1 // pred_check
      _
    $region31: #{antibiotics_forward.1} parent=1 // pred_check_branch
      %36 = sbr.rel (0) target = $region33
    $region32: #{antibiotics_forward.1} parent=1 // pred_region
      %37 = dma.done [#allocation3], 16
    $region33: #{antibiotics_forward.1} parent=1 // pred_fallthru
      _
    %38 = sfence
    %v39 = vld [vmem:[%s1] sm:$0xff]
    %v40 = vunpack.c.0.s8 %v39
    %v41 = vunpack.c.1.s8 %v39
    %v42 = vunpack.c.2.s8 %v39
    %v43 = vunpack.c.3.s8 %v39
    %v44 = vcvt.s32.f32 %v40
    %v45 = vcvt.s32.f32 %v41
    %v46 = vcvt.s32.f32 %v42
    %v47 = vcvt.s32.f32 %v43
    %v48 = vld [vmem:[%s2] sm:$0xff]
    %v49 = vunpack.c.0.s8 %v48
    %v50 = vunpack.c.1.s8 %v48
    %v51 = vunpack.c.2.s8 %v48
    %v52 = vunpack.c.3.s8 %v48
    %v53 = vcvt.s32.f32 %v49
    %v54 = vcvt.s32.f32 %v50
    %v55 = vcvt.s32.f32 %v51
    %v56 = vcvt.s32.f32 %v52
    %v57 = vld [vmem:[%s3] sm:$0xff]
    %v58 = vunpack.c.0.s8 %v57
    %v59 = vunpack.c.1.s8 %v57
    %v60 = vunpack.c.2.s8 %v57
    %v61 = vunpack.c.3.s8 %v57
    %v62 = vcvt.s32.f32 %v58
    %v63 = vcvt.s32.f32 %v59
    %v64 = vcvt.s32.f32 %v60
    %v65 = vcvt.s32.f32 %v61
    %v66 = vld [vmem:[%s4] sm:$0xff]
    %v67 = vunpack.c.0.s8 %v66
    %v68 = vunpack.c.1.s8 %v66
    %v69 = vunpack.c.2.s8 %v66
    %v70 = vunpack.c.3.s8 %v66
    %v71 = vcvt.s32.f32 %v67
    %v72 = vcvt.s32.f32 %v68
    %v73 = vcvt.s32.f32 %v69
    %v74 = vcvt.s32.f32 %v70
    %v75 = vld [vmem:[%s5] sm:$0xff]
    %v76 = vunpack.c.0.s8 %v75
    %v77 = vunpack.c.1.s8 %v75
    %v78 = vunpack.c.2.s8 %v75
    %v79 = vunpack.c.3.s8 %v75
    %v80 = vcvt.s32.f32 %v76
    %v81 = vcvt.s32.f32 %v77
    %v82 = vcvt.s32.f32 %v78
    %v83 = vcvt.s32.f32 %v79
    %v84 = vld [vmem:[%s6] sm:$0xff]
    %v85 = vunpack.c.0.s8 %v84
    %v86 = vunpack.c.1.s8 %v84
    %v87 = vunpack.c.2.s8 %v84
    %v88 = vunpack.c.3.s8 %v84
    %v89 = vcvt.s32.f32 %v85
    %v90 = vcvt.s32.f32 %v86
    %v91 = vcvt.s32.f32 %v87
    %v92 = vcvt.s32.f32 %v88
    %vm93 = vcmp.eq.f32.partialorder %v80, 1.0
    %vm94 = vcmp.eq.f32.partialorder %v81, 1.0
    %vm95 = vcmp.eq.f32.partialorder %v82, 1.0
    %vm96 = vcmp.eq.f32.partialorder %v83, 1.0
    %v97 = vsel %vm93, 1, 0
    %v98 = vsel %vm94, 1, 0
    %v99 = vsel %vm95, 1, 0
    %v100 = vsel %vm96, 1, 0
    %v101 = vcvt.s32.f32 %v97
    %v102 = vcvt.s32.f32 %v98
    %v103 = vcvt.s32.f32 %v99
    %v104 = vcvt.s32.f32 %v100
    %vm105 = vcmp.eq.f32.partialorder %v80, 2.0
    %vm106 = vcmp.eq.f32.partialorder %v81, 2.0
    %vm107 = vcmp.eq.f32.partialorder %v82, 2.0
    %vm108 = vcmp.eq.f32.partialorder %v83, 2.0
    %v109 = vsel %vm105, 1, 0
    %v110 = vsel %vm106, 1, 0
    %v111 = vsel %vm107, 1, 0
    %v112 = vsel %vm108, 1, 0
    %v113 = vcvt.s32.f32 %v109
    %v114 = vcvt.s32.f32 %v110
    %v115 = vcvt.s32.f32 %v111
    %v116 = vcvt.s32.f32 %v112
    %s117 = sld [smem:[#allocation2]]
    %s118 = sld [smem:[#allocation2 + $0x1]]
    %v119 = vstv %s118
    %v120 = vmul.f32 %v119, %v44
    %v121 = vmul.f32 %v119, %v45
    %v122 = vmul.f32 %v119, %v46
    %v123 = vmul.f32 %v119, %v47
    %v124 = vstv %s117
    %v125 = vadd.f32 %v124, %v120
    %v126 = vadd.f32 %v124, %v121
    %v127 = vadd.f32 %v124, %v122
    %v128 = vadd.f32 %v124, %v123
    %s129 = sld [smem:[#allocation2 + $0x2]]
    %v130 = vstv %s129
    %v131 = vmul.f32 %v130, %v53
    %v132 = vmul.f32 %v130, %v54
    %v133 = vmul.f32 %v130, %v55
    %v134 = vmul.f32 %v130, %v56
    %v135 = vadd.f32 %v125, %v131
    %v136 = vadd.f32 %v126, %v132
    %v137 = vadd.f32 %v127, %v133
    %v138 = vadd.f32 %v128, %v134
    %s139 = sld [smem:[#allocation2 + $0x3]]
    %v140 = vstv %s139
    %v141 = vmul.f32 %v140, %v62
    %v142 = vmul.f32 %v140, %v63
    %v143 = vmul.f32 %v140, %v64
    %v144 = vmul.f32 %v140, %v65
    %v145 = vadd.f32 %v135, %v141
    %v146 = vadd.f32 %v136, %v142
    %v147 = vadd.f32 %v137, %v143
    %v148 = vadd.f32 %v138, %v144
    %s149 = sld [smem:[#allocation2 + $0x4]]
    %v150 = vstv %s149
    %v151 = vmul.f32 %v150, %v71
    %v152 = vmul.f32 %v150, %v72
    %v153 = vmul.f32 %v150, %v73
    %v154 = vmul.f32 %v150, %v74
    %v155 = vadd.f32 %v145, %v151
    %v156 = vadd.f32 %v146, %v152
    %v157 = vadd.f32 %v147, %v153
    %v158 = vadd.f32 %v148, %v154
    %s159 = sld [smem:[#allocation2 + $0x5]]
    %v160 = vstv %s159
    %v161 = vmul.f32 %v160, %v101
    %v162 = vmul.f32 %v160, %v102
    %v163 = vmul.f32 %v160, %v103
    %v164 = vmul.f32 %v160, %v104
    %v165 = vadd.f32 %v155, %v161
    %v166 = vadd.f32 %v156, %v162
    %v167 = vadd.f32 %v157, %v163
    %v168 = vadd.f32 %v158, %v164
    %s169 = sld [smem:[#allocation2 + $0x6]]
    %v170 = vstv %s169
    %v171 = vmul.f32 %v170, %v113
    %v172 = vmul.f32 %v170, %v114
    %v173 = vmul.f32 %v170, %v115
    %v174 = vmul.f32 %v170, %v116
    %v175 = vadd.f32 %v165, %v171
    %v176 = vadd.f32 %v166, %v172
    %v177 = vadd.f32 %v167, %v173
    %v178 = vadd.f32 %v168, %v174
    %vm179 = vcmp.eq.f32.partialorder %v89, 1.0
    %vm180 = vcmp.eq.f32.partialorder %v90, 1.0
    %vm181 = vcmp.eq.f32.partialorder %v91, 1.0
    %vm182 = vcmp.eq.f32.partialorder %v92, 1.0
    %v183 = vsub.f32 0.0, %v175
    %v184 = vsub.f32 0.0, %v176
    %v185 = vsub.f32 0.0, %v177
    %v186 = vsub.f32 0.0, %v178
    %v187 = vsel %vm179, %v175, %v183
    %v188 = vsel %vm180, %v176, %v184
    %v189 = vsel %vm181, %v177, %v185
    %v190 = vsel %vm182, %v178, %v186
    %v191 = vmin.f32 %v187, 0.0
    %v192 = vmin.f32 %v188, 0.0
    %v193 = vmin.f32 %v189, 0.0
    %v194 = vmin.f32 %v190, 0.0
    %v195 = vand.u32 2147483647, %v187
    %v196 = vand.u32 2147483647, %v188
    %v197 = vand.u32 2147483647, %v189
    %v198 = vand.u32 2147483647, %v190
    %v199 = vsub.f32 0.0, %v195
    %v200 = vsub.f32 0.0, %v196
    %v201 = vsub.f32 0.0, %v197
    %v202 = vsub.f32 0.0, %v198
    %v203 = vmul.f32 %v199, 1.442695
    %v204 = vpow.pop %v203
    %v205 = vmul.f32 %v200, 1.442695
    %v206 = vpow.pop %v205
    %v207 = vmul.f32 %v201, 1.442695
    %v208 = vpow.pop %v207
    %v209 = vmul.f32 %v202, 1.442695
    %v210 = vpow.pop %v209
    %v211 = vadd.f32 %v204, 1.0
    %v212 = vlog2.pop %v211
    %v213 = vmul.f32 %v212, 0.6931472
    %v214 = vmul.f32 -0.5, %v204
    %v215 = vadd.f32 %v214, 1.0
    %v216 = vmul.f32 %v215, %v204
    %v217 = vand.u32 2147483647, %v204
    %vm218 = vcmp.lt.f32.partialorder %v217, 0.0004427343
    %v219 = vsel %vm218, %v216, %v213
    %v220 = vadd.f32 %v206, 1.0
    %v221 = vlog2.pop %v220
    %v222 = vmul.f32 %v221, 0.6931472
    %v223 = vmul.f32 -0.5, %v206
    %v224 = vadd.f32 %v223, 1.0
    %v225 = vmul.f32 %v224, %v206
    %v226 = vand.u32 2147483647, %v206
    %vm227 = vcmp.lt.f32.partialorder %v226, 0.0004427343
    %v228 = vsel %vm227, %v225, %v222
    %v229 = vadd.f32 %v208, 1.0
    %v230 = vlog2.pop %v229
    %v231 = vmul.f32 %v230, 0.6931472
    %v232 = vmul.f32 -0.5, %v208
    %v233 = vadd.f32 %v232, 1.0
    %v234 = vmul.f32 %v233, %v208
    %v235 = vand.u32 2147483647, %v208
    %vm236 = vcmp.lt.f32.partialorder %v235, 0.0004427343
    %v237 = vsel %vm236, %v234, %v231
    %v238 = vadd.f32 %v210, 1.0
    %v239 = vlog2.pop %v238
    %v240 = vmul.f32 %v239, 0.6931472
    %v241 = vmul.f32 -0.5, %v210
    %v242 = vadd.f32 %v241, 1.0
    %v243 = vmul.f32 %v242, %v210
    %v244 = vand.u32 2147483647, %v210
    %vm245 = vcmp.lt.f32.partialorder %v244, 0.0004427343
    %v246 = vsel %vm245, %v243, %v240
    %v247 = vsub.f32 %v191, %v219
    %v248 = vsub.f32 %v192, %v228
    %v249 = vsub.f32 %v193, %v237
    %v250 = vsub.f32 %v194, %v246
    %251 = vst [vmem:[%s7] sm:$0xff] %v247
    %252 = vst [vmem:[%s7 + $0x8] sm:$0xff] %v248
    %253 = vst [vmem:[%s7 + $0x10] sm:$0xff] %v249
    %254 = vst [vmem:[%s7 + $0x18] sm:$0xff] %v250
    // Predicated region
    $region34: #{antibiotics_forward.1} parent=1 // pred_check
      _
    $region35: #{antibiotics_forward.1} parent=1 // pred_check_branch
      %256 = sbr.rel (0) target = $region37
    $region36: #{antibiotics_forward.1} parent=1 // pred_region
      _
    $region37: #{antibiotics_forward.1} parent=1 // pred_fallthru
      _
    // Predicated region
    $region38: #{antibiotics_forward.1} parent=1 // pred_check
      _
    $region39: #{antibiotics_forward.1} parent=1 // pred_check_branch
      %258 = sbr.rel (0) target = $region41
    $region40: #{antibiotics_forward.1} parent=1 // pred_region
      _
    $region41: #{antibiotics_forward.1} parent=1 // pred_fallthru
      _
    %259 = vsyncpa [#allocation3], 1

</llo_original>
